<compile_context>
chip_gen: v7x
topology: tpu7x:2x2x1
jax: 0.10.0
libtpu: 0.0.40
codegen_flags: <defaults>
</compile_context>

<pallas_src>
import jax
import jax.numpy as jnp
from jax.experimental import pallas as pl
from jax.experimental.pallas import tpu as pltpu


def _softplus(x):
    # Numerically stable softplus: max(x, 0) + log1p(exp(-|x|))
    return jnp.maximum(x, 0.0) + jnp.log1p(jnp.exp(-jnp.abs(x)))


def learned_volatility_kernel(t_ref,
                              w1_ref, b1_ref,
                              w2_ref, b2_ref,
                              w3_ref, b3_ref,
                              w4_ref, b4_ref,
                              o_ref):
    t = t_ref[...]                                            # (1, TILE_B) f32, batch on lanes

    # Layer 1 (1 -> 64): degenerate K=1 contraction -> pure VPU broadcast
    # multiply instead of an MXU outer product.
    h = jnp.maximum(w1_ref[...] * t + b1_ref[...], 0.0)      # (64, TILE_B) f32

    # Layers 2-3 (64 -> 64): bf16 MXU matmuls with f32 accumulation.
    # W2/W3 arrive already in bf16 (cast once in the wrapper); the activation
    # is cast to bf16 at the dot input only.  Bias+ReLU stay f32 (v5e-safe).
    h = jnp.maximum(
        jnp.dot(w2_ref[...], h.astype(jnp.bfloat16),
                preferred_element_type=jnp.float32) + b2_ref[...],
        0.0)
    h = jnp.maximum(
        jnp.dot(w3_ref[...], h.astype(jnp.bfloat16),
                preferred_element_type=jnp.float32) + b3_ref[...],
        0.0)

    # Output layer (64 -> 1): VPU broadcast multiply + cross-sublane (XLU)
    # reduce -- avoids an M=1 MXU matmul and rides otherwise-idle slots.
    y = jnp.sum(w4_ref[...] * h, axis=0, keepdims=True) + b4_ref[...]   # (1, TILE_B)

    o_ref[...] = _softplus(y).astype(o_ref.dtype)


def learned_volatility(t, params, *, tile_b=8192):
    """t: (B, 1) float32.  params: (W1,b1,...,W4,b4) with W_i (out,in), b_i (out,1)."""
    w1, b1, w2, b2, w3, b3, w4, b4 = params
    B = t.shape[0]

    # Lane tile: multiple of 128; don't over-pad tiny batches.
    tile_b = min(tile_b, pl.cdiv(max(B, 1), 128) * 128)
    b_pad = pl.cdiv(B, tile_b) * tile_b
    num_tiles = b_pad // tile_b

    # Transpose batch onto lanes and zero-pad to the tile boundary.
    t_lanes = jnp.pad(t.reshape(1, B).astype(jnp.float32),
                      ((0, 0), (0, b_pad - B)))

    # Kernel-side parameter layout / dtypes (casts happen ONCE here, not per
    # grid step inside the kernel):
    #   W2/W3 -> bf16 MXU inputs; W4 -> (64,1) column for the VPU dot.
    kparams = (
        w1.astype(jnp.float32),                 # (64, 1)
        b1.astype(jnp.float32),                 # (64, 1)
        w2.astype(jnp.bfloat16),                # (64, 64)
        b2.astype(jnp.float32),                 # (64, 1)
        w3.astype(jnp.bfloat16),                # (64, 64)
        b3.astype(jnp.float32),                 # (64, 1)
        w4.reshape(64, 1).astype(jnp.float32),  # (64, 1)
        b4.reshape(1, 1).astype(jnp.float32),   # (1, 1)
    )

    # t / out: tiled along the lane (batch) dim.  Weights/biases: full-array
    # blocks with a constant index_map, so they stay VMEM-resident across all
    # grid steps (no per-step re-DMA).
    in_specs = [pl.BlockSpec((1, tile_b), lambda i: (0, i))]
    in_specs += [pl.BlockSpec(p.shape, lambda i: (0, 0)) for p in kparams]
    out_specs = pl.BlockSpec((1, tile_b), lambda i: (0, i))

    # v7x dual-TensorCore sharding only makes sense (and is only safe) when
    # the batch grid really has >= 2 evenly splittable steps.
    if num_tiles >= 2 and num_tiles % 2 == 0:
        dim_sem = (pltpu.CORE_PARALLEL,)
    else:
        dim_sem = ("arbitrary",)

    # Advisory cost hint for XLA's scheduler.
    flops = 16966 * b_pad                       # ~2*64*64*2 MXU + layer1/4 + bias/relu
    transcendentals = 2 * b_pad                 # softplus: exp + log1p per element
    bytes_accessed = int(
        b_pad * 4            # t
        + b_pad * 4          # out
        + sum(int(p.size) * p.dtype.itemsize for p in kparams))
    cost = pl.CostEstimate(flops=flops,
                           transcendentals=transcendentals,
                           bytes_accessed=bytes_accessed)

    out = pl.pallas_call(
        learned_volatility_kernel,
        out_shape=jax.ShapeDtypeStruct((1, b_pad), jnp.float32),
        grid=(num_tiles,),
        in_specs=in_specs,
        out_specs=out_specs,
        compiler_params=pltpu.CompilerParams(
            dimension_semantics=dim_sem,
            vmem_limit_bytes=32 * 1024 * 1024),   # room for tile_b=8192 on v5e too
        cost_estimate=cost,
    )(t_lanes, *kparams)

    return out[0, :B].reshape(B, 1)


def init_params(key):
    """Deterministic init matching the PyTorch module's shapes.

    MLP(n_inputs=1, n_hidden=[64, 64, 64], n_outputs=1):
      Linear(1,64), Linear(64,64), Linear(64,64), Linear(64,1)
    Weights stored as (out_features, in_features); biases as (out_features, 1).
    """
    dims = [(64, 1), (64, 64), (64, 64), (1, 64)]  # (out, in)
    params = []
    for out_f, in_f in dims:
        kw, kb, key = jax.random.split(key, 3)
        bound = 1.0 / jnp.sqrt(in_f)  # PyTorch default Linear init range
        w = jax.random.uniform(kw, (out_f, in_f), jnp.float32, -bound, bound)
        b = jax.random.uniform(kb, (out_f, 1), jnp.float32, -bound, bound)
        params.extend([w, b])
    return tuple(params)


def reference_forward(t, params):
    """Pure-JAX f32 reference (batch-first layout) for sanity checking."""
    w1, b1, w2, b2, w3, b3, w4, b4 = params
    h = jnp.maximum(t @ w1.T + b1.T, 0.0)
    h = jnp.maximum(h @ w2.T + b2.T, 0.0)
    h = jnp.maximum(h @ w3.T + b3.T, 0.0)
    y = h @ w4.T + b4.T
    return jax.nn.softplus(y)


if __name__ == "__main__":
    key = jax.random.PRNGKey(0)
    k_t, k_p = jax.random.split(key)

    B = 8  # small batch of scalar times t
    t = jax.random.uniform(k_t, (B, 1), jnp.float32)  # t in [0, 1)

    params = init_params(k_p)

    out = learned_volatility(t, params)
    out = jax.block_until_ready(out)

    ref = reference_forward(t, params)
    assert out.shape == (B, 1), out.shape
    # bf16 MXU inputs (f32 accumulation) -> relax tolerance vs the f32 reference.
    assert jnp.allclose(out, ref, atol=2e-2, rtol=2e-2), (out, ref)

    print("KERNEL_OK")
</pallas_src>

<mosaic_0001>
module attributes {stable_mosaic.version = 11 : i64} {
  func.func @learned_volatility_kernel(%arg0: i32, %arg1: memref<1x128xf32, #tpu.memory_space<vmem>>, %arg2: memref<64x1xf32, #tpu.memory_space<vmem>>, %arg3: memref<64x1xf32, #tpu.memory_space<vmem>>, %arg4: memref<64x64xbf16, #tpu.memory_space<vmem>>, %arg5: memref<64x1xf32, #tpu.memory_space<vmem>>, %arg6: memref<64x64xbf16, #tpu.memory_space<vmem>>, %arg7: memref<64x1xf32, #tpu.memory_space<vmem>>, %arg8: memref<64x1xf32, #tpu.memory_space<vmem>>, %arg9: memref<1x1xf32, #tpu.memory_space<vmem>>, %arg10: memref<1x128xf32, #tpu.memory_space<vmem>>) attributes {dimension_semantics = [#tpu.dimension_semantics<arbitrary>], iteration_bounds = array<i64: 1>, scalar_prefetch = 0 : i64, scratch_operands = 0 : i64, tpu.core_type = #tpu.core_type<tc>, window_params = [{transform_indices = @transform_0, window_bounds = array<i64: 1, 128>}, {pipeline_mode = #tpu.pipeline_mode<synchronous>, transform_indices = @transform_1, window_bounds = array<i64: 64, 1>}, {pipeline_mode = #tpu.pipeline_mode<synchronous>, transform_indices = @transform_2, window_bounds = array<i64: 64, 1>}, {pipeline_mode = #tpu.pipeline_mode<synchronous>, transform_indices = @transform_3, window_bounds = array<i64: 64, 64>}, {pipeline_mode = #tpu.pipeline_mode<synchronous>, transform_indices = @transform_4, window_bounds = array<i64: 64, 1>}, {pipeline_mode = #tpu.pipeline_mode<synchronous>, transform_indices = @transform_5, window_bounds = array<i64: 64, 64>}, {pipeline_mode = #tpu.pipeline_mode<synchronous>, transform_indices = @transform_6, window_bounds = array<i64: 64, 1>}, {pipeline_mode = #tpu.pipeline_mode<synchronous>, transform_indices = @transform_7, window_bounds = array<i64: 64, 1>}, {pipeline_mode = #tpu.pipeline_mode<synchronous>, transform_indices = @transform_8, window_bounds = array<i64: 1, 1>}, {transform_indices = @transform_9, window_bounds = array<i64: 1, 128>}]} {
    %c0 = arith.constant 0 : index
    %c0_0 = arith.constant 0 : index
    %0 = vector.load %arg1[%c0, %c0_0] : memref<1x128xf32, #tpu.memory_space<vmem>>, vector<1x128xf32>
    %c0_1 = arith.constant 0 : index
    %c0_2 = arith.constant 0 : index
    %1 = vector.load %arg2[%c0_1, %c0_2] : memref<64x1xf32, #tpu.memory_space<vmem>>, vector<64x1xf32>
    %2 = vector.broadcast %1 : vector<64x1xf32> to vector<64x128xf32>
    %3 = vector.broadcast %0 : vector<1x128xf32> to vector<64x128xf32>
    %4 = arith.mulf %2, %3 : vector<64x128xf32>
    %c0_3 = arith.constant 0 : index
    %c0_4 = arith.constant 0 : index
    %5 = vector.load %arg3[%c0_3, %c0_4] : memref<64x1xf32, #tpu.memory_space<vmem>>, vector<64x1xf32>
    %6 = vector.broadcast %5 : vector<64x1xf32> to vector<64x128xf32>
    %7 = arith.addf %4, %6 : vector<64x128xf32>
    %cst = arith.constant 0.000000e+00 : f32
    %8 = vector.broadcast %cst : f32 to vector<64x128xf32>
    %9 = arith.maximumf %7, %8 : vector<64x128xf32>
    %c0_5 = arith.constant 0 : index
    %c0_6 = arith.constant 0 : index
    %10 = vector.load %arg4[%c0_5, %c0_6] : memref<64x64xbf16, #tpu.memory_space<vmem>>, vector<64x64xbf16>
    %11 = arith.truncf %9 : vector<64x128xf32> to vector<64x128xbf16>
    %cst_7 = arith.constant dense<0.000000e+00> : vector<64x128xf32>
    %12 = tpu.matmul %10, %11, %cst_7 {dimension_numbers = #tpu.dot_dimension_numbers<[1], [0], [0], [1], [0, 0, 1, 1], [], []>} : vector<64x64xbf16>, vector<64x128xbf16>, vector<64x128xf32> -> vector<64x128xf32>
    %c0_8 = arith.constant 0 : index
    %c0_9 = arith.constant 0 : index
    %13 = vector.load %arg5[%c0_8, %c0_9] : memref<64x1xf32, #tpu.memory_space<vmem>>, vector<64x1xf32>
    %14 = vector.broadcast %13 : vector<64x1xf32> to vector<64x128xf32>
    %15 = arith.addf %12, %14 : vector<64x128xf32>
    %cst_10 = arith.constant 0.000000e+00 : f32
    %16 = vector.broadcast %cst_10 : f32 to vector<64x128xf32>
    %17 = arith.maximumf %15, %16 : vector<64x128xf32>
    %c0_11 = arith.constant 0 : index
    %c0_12 = arith.constant 0 : index
    %18 = vector.load %arg6[%c0_11, %c0_12] : memref<64x64xbf16, #tpu.memory_space<vmem>>, vector<64x64xbf16>
    %19 = arith.truncf %17 : vector<64x128xf32> to vector<64x128xbf16>
    %cst_13 = arith.constant dense<0.000000e+00> : vector<64x128xf32>
    %20 = tpu.matmul %18, %19, %cst_13 {dimension_numbers = #tpu.dot_dimension_numbers<[1], [0], [0], [1], [0, 0, 1, 1], [], []>} : vector<64x64xbf16>, vector<64x128xbf16>, vector<64x128xf32> -> vector<64x128xf32>
    %c0_14 = arith.constant 0 : index
    %c0_15 = arith.constant 0 : index
    %21 = vector.load %arg7[%c0_14, %c0_15] : memref<64x1xf32, #tpu.memory_space<vmem>>, vector<64x1xf32>
    %22 = vector.broadcast %21 : vector<64x1xf32> to vector<64x128xf32>
    %23 = arith.addf %20, %22 : vector<64x128xf32>
    %cst_16 = arith.constant 0.000000e+00 : f32
    %24 = vector.broadcast %cst_16 : f32 to vector<64x128xf32>
    %25 = arith.maximumf %23, %24 : vector<64x128xf32>
    %c0_17 = arith.constant 0 : index
    %c0_18 = arith.constant 0 : index
    %26 = vector.load %arg8[%c0_17, %c0_18] : memref<64x1xf32, #tpu.memory_space<vmem>>, vector<64x1xf32>
    %27 = vector.broadcast %26 : vector<64x1xf32> to vector<64x128xf32>
    %28 = arith.mulf %27, %25 : vector<64x128xf32>
    %cst_19 = arith.constant dense<0.000000e+00> : vector<128xf32>
    %29 = vector.multi_reduction <add>, %28, %cst_19 [0] : vector<64x128xf32> to vector<128xf32>
    %30 = vector.shape_cast %29 : vector<128xf32> to vector<1x128xf32>
    %c0_20 = arith.constant 0 : index
    %c0_21 = arith.constant 0 : index
    %31 = vector.load %arg9[%c0_20, %c0_21] : memref<1x1xf32, #tpu.memory_space<vmem>>, vector<1x1xf32>
    %32 = vector.broadcast %31 : vector<1x1xf32> to vector<1x128xf32>
    %33 = arith.addf %30, %32 : vector<1x128xf32>
    %cst_22 = arith.constant 0.000000e+00 : f32
    %34 = vector.broadcast %cst_22 : f32 to vector<1x128xf32>
    %35 = arith.maximumf %33, %34 : vector<1x128xf32>
    %36 = math.absf %33 : vector<1x128xf32>
    %cst_23 = arith.constant 0.000000e+00 : f32
    %37 = vector.broadcast %cst_23 : f32 to vector<1x128xf32>
    %38 = arith.subf %37, %36 : vector<1x128xf32>
    %39 = math.exp %38 : vector<1x128xf32>
    %40 = math.log1p %39 : vector<1x128xf32>
    %41 = arith.addf %35, %40 : vector<1x128xf32>
    %c0_24 = arith.constant 0 : index
    %c0_25 = arith.constant 0 : index
    %42 = vector.load %arg10[%c0_24, %c0_25] : memref<1x128xf32, #tpu.memory_space<vmem>>, vector<1x128xf32>
    tpu.vector_store %arg10[%c0_24, %c0_25], %41 {strides = array<i32>} : memref<1x128xf32, #tpu.memory_space<vmem>>, vector<1x128xf32>,
    return
  }
  func.func @transform_0(%arg0: i32) -> (i32, i32) {
    %c0_i32 = arith.constant 0 : i32
    %c0_i32_0 = arith.constant 0 : i32
    return %c0_i32, %arg0 : i32, i32
  }
  func.func @transform_1(%arg0: i32) -> (i32, i32) {
    %c0_i32 = arith.constant 0 : i32
    %c0_i32_0 = arith.constant 0 : i32
    %c0_i32_1 = arith.constant 0 : i32
    return %c0_i32, %c0_i32_0 : i32, i32
  }
  func.func @transform_2(%arg0: i32) -> (i32, i32) {
    %c0_i32 = arith.constant 0 : i32
    %c0_i32_0 = arith.constant 0 : i32
    %c0_i32_1 = arith.constant 0 : i32
    return %c0_i32, %c0_i32_0 : i32, i32
  }
  func.func @transform_3(%arg0: i32) -> (i32, i32) {
    %c0_i32 = arith.constant 0 : i32
    %c0_i32_0 = arith.constant 0 : i32
    %c0_i32_1 = arith.constant 0 : i32
    return %c0_i32, %c0_i32_0 : i32, i32
  }
  func.func @transform_4(%arg0: i32) -> (i32, i32) {
    %c0_i32 = arith.constant 0 : i32
    %c0_i32_0 = arith.constant 0 : i32
    %c0_i32_1 = arith.constant 0 : i32
    return %c0_i32, %c0_i32_0 : i32, i32
  }
  func.func @transform_5(%arg0: i32) -> (i32, i32) {
    %c0_i32 = arith.constant 0 : i32
    %c0_i32_0 = arith.constant 0 : i32
    %c0_i32_1 = arith.constant 0 : i32
    return %c0_i32, %c0_i32_0 : i32, i32
  }
  func.func @transform_6(%arg0: i32) -> (i32, i32) {
    %c0_i32 = arith.constant 0 : i32
    %c0_i32_0 = arith.constant 0 : i32
    %c0_i32_1 = arith.constant 0 : i32
    return %c0_i32, %c0_i32_0 : i32, i32
  }
  func.func @transform_7(%arg0: i32) -> (i32, i32) {
    %c0_i32 = arith.constant 0 : i32
    %c0_i32_0 = arith.constant 0 : i32
    %c0_i32_1 = arith.constant 0 : i32
    return %c0_i32, %c0_i32_0 : i32, i32
  }
  func.func @transform_8(%arg0: i32) -> (i32, i32) {
    %c0_i32 = arith.constant 0 : i32
    %c0_i32_0 = arith.constant 0 : i32
    %c0_i32_1 = arith.constant 0 : i32
    return %c0_i32, %c0_i32_0 : i32, i32
  }
  func.func @transform_9(%arg0: i32) -> (i32, i32) {
    %c0_i32 = arith.constant 0 : i32
    %c0_i32_0 = arith.constant 0 : i32
    return %c0_i32, %arg0 : i32, i32
  }
}

</mosaic_0001>

<llo_original>
// kernel: tpu_custom_call.1
$region0: #{tpu_custom_call.1}
  #allocation0 [shape = 'u32[]', space=smem, size = 0x4, offset = 0x4, fixed_abs, tag = 'smem constant byte address 0x4 - core index']
  #allocation1 [shape = 'u32[144,128]{1,0:T(1,128)}', space=vmem, size = 0x12000, scoped, tag = 'internal scratch']
  #allocation2 [shape = 'f32[1,1]{1,0:T(1,128)S(1)}', space=vmem, size = 0x200, scoped, tag = 'scoped memory for tpu_custom_call.1']
  %s0 = inlined_call_operand.vmem [shape: f32[1,128], index: 0, kind: input, shape index: {}]
  %s1 = inlined_call_operand.vmem [shape: f32[64,1], index: 1, kind: input, shape index: {}]
  %s2 = inlined_call_operand.vmem [shape: f32[64,1], index: 2, kind: input, shape index: {}]
  %s3 = inlined_call_operand.vmem [shape: bf16[64,64], index: 3, kind: input, shape index: {}]
  %s4 = inlined_call_operand.vmem [shape: f32[64,1], index: 4, kind: input, shape index: {}]
  %s5 = inlined_call_operand.vmem [shape: bf16[64,64], index: 5, kind: input, shape index: {}]
  %s6 = inlined_call_operand.vmem [shape: f32[64,1], index: 6, kind: input, shape index: {}]
  %s7 = inlined_call_operand.vmem [shape: f32[64,1], index: 7, kind: input, shape index: {}]
  %s8 = inlined_call_operand.<no memory space> [shape: f32[1,1], index: 8, kind: input, shape index: {}]
  %s9 = inlined_call_operand.hbm [shape: f32[1,128], index: 9, kind: output, shape index: {}]
  %s10 = sld [smem:[#allocation0]]
  $region46: #{tpu_custom_call.1} parent=0
    _
  %s12 = ssub.s32 1, %s10
  %s13 = scalar_select 0, %s12, %s10
  %v14 = vstv %s8
  %15 = vst [vmem:[#allocation2] sm:$0x1] %v14
  $region1: #{tpu_custom_call.1} parent=0
    #allocation3 [shape = 'u8[512]{0}', space=vmem, size = 0x400, scoped, tag = 'output window, operand 0, single buffered']
    #allocation4 [shape = 's32[1]{0}', space=sflag, size = 0x4, scoped, tag = 'scoped memory for tpu_custom_call.1']
    %16 = vsyncpa [#allocation4], 0
    // Predicated region
    $region2: #{tpu_custom_call.1} parent=1 // pred_check
      _
    $region3: #{tpu_custom_call.1} parent=1 // pred_check_branch
      %18 = sbr.rel (0) target = $region5
    $region4: #{tpu_custom_call.1} parent=1 // pred_region
      _
    $region5: #{tpu_custom_call.1} parent=1 // pred_fallthru
      _
    // Predicated region
    $region6: #{tpu_custom_call.1} parent=1 // pred_check
      _
    $region7: #{tpu_custom_call.1} parent=1 // pred_check_branch
      %20 = sbr.rel (0) target = $region9
    $region8: #{tpu_custom_call.1} parent=1 // pred_region
      _
    $region9: #{tpu_custom_call.1} parent=1 // pred_fallthru
      _
    // Predicated region
    $region10: #{tpu_custom_call.1} parent=1 // pred_check
      _
    $region11: #{tpu_custom_call.1} parent=1 // pred_check_branch
      %22 = sbr.rel (0) target = $region13
    $region12: #{tpu_custom_call.1} parent=1 // pred_region
      _
    $region13: #{tpu_custom_call.1} parent=1 // pred_fallthru
      _
    // Predicated region
    $region14: #{tpu_custom_call.1} parent=1 // pred_check
      _
    $region15: #{tpu_custom_call.1} parent=1 // pred_check_branch
      %24 = sbr.rel (0) target = $region17
    $region16: #{tpu_custom_call.1} parent=1 // pred_region
      _
    $region17: #{tpu_custom_call.1} parent=1 // pred_fallthru
      _
    // Predicated region
    $region18: #{tpu_custom_call.1} parent=1 // pred_check
      _
    $region19: #{tpu_custom_call.1} parent=1 // pred_check_branch
      %26 = sbr.rel (0) target = $region21
    $region20: #{tpu_custom_call.1} parent=1 // pred_region
      _
    $region21: #{tpu_custom_call.1} parent=1 // pred_fallthru
      _
    // Predicated region
    $region22: #{tpu_custom_call.1} parent=1 // pred_check
      _
    $region23: #{tpu_custom_call.1} parent=1 // pred_check_branch
      %28 = sbr.rel (0) target = $region25
    $region24: #{tpu_custom_call.1} parent=1 // pred_region
      _
    $region25: #{tpu_custom_call.1} parent=1 // pred_fallthru
      _
    // Predicated region
    $region26: #{tpu_custom_call.1} parent=1 // pred_check
      _
    $region27: #{tpu_custom_call.1} parent=1 // pred_check_branch
      %30 = sbr.rel (0) target = $region29
    $region28: #{tpu_custom_call.1} parent=1 // pred_region
      _
    $region29: #{tpu_custom_call.1} parent=1 // pred_fallthru
      _
    // Predicated region
    $region30: #{tpu_custom_call.1} parent=1 // pred_check
      _
    $region31: #{tpu_custom_call.1} parent=1 // pred_check_branch
      %32 = sbr.rel (0) target = $region33
    $region32: #{tpu_custom_call.1} parent=1 // pred_region
      _
    $region33: #{tpu_custom_call.1} parent=1 // pred_fallthru
      _
    // Predicated region
    $region34: #{tpu_custom_call.1} parent=1 // pred_check
      _
    $region35: #{tpu_custom_call.1} parent=1 // pred_check_branch
      %34 = sbr.rel (0) target = $region37
    $region36: #{tpu_custom_call.1} parent=1 // pred_region
      _
    $region37: #{tpu_custom_call.1} parent=1 // pred_fallthru
      _
    %v36 = vld [vmem:[%s0] sm:$0x1]
    %v37 = vld [vmem:[%s1] sm:$0xff]
    %v38 = vld [vmem:[%s1 + $0x8] sm:$0xff]
    %v39 = vld [vmem:[%s1 + $0x10] sm:$0xff]
    %v40 = vld [vmem:[%s1 + $0x18] sm:$0xff]
    %v41 = vld [vmem:[%s1 + $0x20] sm:$0xff]
    %v42 = vld [vmem:[%s1 + $0x28] sm:$0xff]
    %v43 = vld [vmem:[%s1 + $0x30] sm:$0xff]
    %v44 = vld [vmem:[%s1 + $0x38] sm:$0xff]
    %46 = vset.pattern.permute.xlu0 0
    %47 = vperm.xlu0 %46, %v37
    %v48 = vpop.permute.xlu0 %47
    %51 = vset.pattern.permute.xlu0 0
    %52 = vperm.xlu0 %51, %v38
    %v53 = vpop.permute.xlu0 %52
    %56 = vset.pattern.permute.xlu0 0
    %57 = vperm.xlu0 %56, %v39
    %v58 = vpop.permute.xlu0 %57
    %61 = vset.pattern.permute.xlu0 0
    %62 = vperm.xlu0 %61, %v40
    %v63 = vpop.permute.xlu0 %62
    %66 = vset.pattern.permute.xlu0 0
    %67 = vperm.xlu0 %66, %v41
    %v68 = vpop.permute.xlu0 %67
    %71 = vset.pattern.permute.xlu0 0
    %72 = vperm.xlu0 %71, %v42
    %v73 = vpop.permute.xlu0 %72
    %76 = vset.pattern.permute.xlu0 0
    %77 = vperm.xlu0 %76, %v43
    %v78 = vpop.permute.xlu0 %77
    %81 = vset.pattern.permute.xlu0 0
    %82 = vperm.xlu0 %81, %v44
    %v83 = vpop.permute.xlu0 %82
    %v86 = vlaneseq
    %v87 = vshrl.u32 %v86, 7
    %v88 = vsub.s32 0, %v87
    %v89 = vrot.slane %v36, %v88
    %v91 = vmul.f32 %v48, %v89
    %v92 = vmul.f32 %v53, %v89
    %v93 = vmul.f32 %v58, %v89
    %v94 = vmul.f32 %v63, %v89
    %v95 = vmul.f32 %v68, %v89
    %v96 = vmul.f32 %v73, %v89
    %v97 = vmul.f32 %v78, %v89
    %v98 = vmul.f32 %v83, %v89
    %v99 = vld [vmem:[%s2] sm:$0xff]
    %v100 = vld [vmem:[%s2 + $0x8] sm:$0xff]
    %v101 = vld [vmem:[%s2 + $0x10] sm:$0xff]
    %v102 = vld [vmem:[%s2 + $0x18] sm:$0xff]
    %v103 = vld [vmem:[%s2 + $0x20] sm:$0xff]
    %v104 = vld [vmem:[%s2 + $0x28] sm:$0xff]
    %v105 = vld [vmem:[%s2 + $0x30] sm:$0xff]
    %v106 = vld [vmem:[%s2 + $0x38] sm:$0xff]
    %108 = vset.pattern.permute.xlu0 0
    %109 = vperm.xlu0 %108, %v99
    %v110 = vpop.permute.xlu0 %109
    %113 = vset.pattern.permute.xlu0 0
    %114 = vperm.xlu0 %113, %v100
    %v115 = vpop.permute.xlu0 %114
    %118 = vset.pattern.permute.xlu0 0
    %119 = vperm.xlu0 %118, %v101
    %v120 = vpop.permute.xlu0 %119
    %123 = vset.pattern.permute.xlu0 0
    %124 = vperm.xlu0 %123, %v102
    %v125 = vpop.permute.xlu0 %124
    %128 = vset.pattern.permute.xlu0 0
    %129 = vperm.xlu0 %128, %v103
    %v130 = vpop.permute.xlu0 %129
    %133 = vset.pattern.permute.xlu0 0
    %134 = vperm.xlu0 %133, %v104
    %v135 = vpop.permute.xlu0 %134
    %138 = vset.pattern.permute.xlu0 0
    %139 = vperm.xlu0 %138, %v105
    %v140 = vpop.permute.xlu0 %139
    %143 = vset.pattern.permute.xlu0 0
    %144 = vperm.xlu0 %143, %v106
    %v145 = vpop.permute.xlu0 %144
    %v147 = vadd.f32 %v91, %v110
    %v148 = vadd.f32 %v92, %v115
    %v149 = vadd.f32 %v93, %v120
    %v150 = vadd.f32 %v94, %v125
    %v151 = vadd.f32 %v95, %v130
    %v152 = vadd.f32 %v96, %v135
    %v153 = vadd.f32 %v97, %v140
    %v154 = vadd.f32 %v98, %v145
    %v155 = vmax.f32 %v147, 0.0
    %v156 = vmax.f32 %v148, 0.0
    %v157 = vmax.f32 %v149, 0.0
    %v158 = vmax.f32 %v150, 0.0
    %v159 = vmax.f32 %v151, 0.0
    %v160 = vmax.f32 %v152, 0.0
    %v161 = vmax.f32 %v153, 0.0
    %v162 = vmax.f32 %v154, 0.0
    %v163 = vld [vmem:[%s3] sm:$0xf]
    %v164 = vld [vmem:[%s3 + $0x4] sm:$0xf]
    %v165 = vld [vmem:[%s3 + $0x8] sm:$0xf]
    %v166 = vld [vmem:[%s3 + $0xc] sm:$0xf]
    %v167 = vld [vmem:[%s3 + $0x10] sm:$0xf]
    %v168 = vld [vmem:[%s3 + $0x14] sm:$0xf]
    %v169 = vld [vmem:[%s3 + $0x18] sm:$0xf]
    %v170 = vld [vmem:[%s3 + $0x1c] sm:$0xf]
    %v171 = vpack.c.bf16 %v156, %v155
    %v172 = vpack.c.bf16 %v158, %v157
    %v173 = vpack.c.bf16 %v160, %v159
    %v174 = vpack.c.bf16 %v162, %v161
    %v175 = vld [vmem:[%s4] sm:$0xff]
    %v176 = vld [vmem:[%s4 + $0x8] sm:$0xff]
    %v177 = vld [vmem:[%s4 + $0x10] sm:$0xff]
    %v178 = vld [vmem:[%s4 + $0x18] sm:$0xff]
    %v179 = vld [vmem:[%s4 + $0x20] sm:$0xff]
    %v180 = vld [vmem:[%s4 + $0x28] sm:$0xff]
    %v181 = vld [vmem:[%s4 + $0x30] sm:$0xff]
    %v182 = vld [vmem:[%s4 + $0x38] sm:$0xff]
    %184 = vset.pattern.permute.xlu0 0
    %185 = vperm.xlu0 %184, %v175
    %v186 = vpop.permute.xlu0 %185
    %189 = vset.pattern.permute.xlu0 0
    %190 = vperm.xlu0 %189, %v176
    %v191 = vpop.permute.xlu0 %190
    %194 = vset.pattern.permute.xlu0 0
    %195 = vperm.xlu0 %194, %v177
    %v196 = vpop.permute.xlu0 %195
    %199 = vset.pattern.permute.xlu0 0
    %200 = vperm.xlu0 %199, %v178
    %v201 = vpop.permute.xlu0 %200
    %204 = vset.pattern.permute.xlu0 0
    %205 = vperm.xlu0 %204, %v179
    %v206 = vpop.permute.xlu0 %205
    %209 = vset.pattern.permute.xlu0 0
    %210 = vperm.xlu0 %209, %v180
    %v211 = vpop.permute.xlu0 %210
    %214 = vset.pattern.permute.xlu0 0
    %215 = vperm.xlu0 %214, %v181
    %v216 = vpop.permute.xlu0 %215
    %219 = vset.pattern.permute.xlu0 0
    %220 = vperm.xlu0 %219, %v182
    %v221 = vpop.permute.xlu0 %220
    %v231 = vunpack.c.l.b16 %v163
    %v232 = vunpack.c.l.b16 %v164
    %v233 = vunpack.c.l.b16 %v165
    %v234 = vunpack.c.l.b16 %v166
    %v235 = vunpack.c.l.b16 %v167
    %v236 = vunpack.c.l.b16 %v168
    %v237 = vunpack.c.l.b16 %v169
    %v238 = vunpack.c.l.b16 %v170
    %v239 = vpack.c.b16 %v232, %v231
    %v240 = vpack.c.b16 %v234, %v233
    %v241 = vpack.c.b16 %v236, %v235
    %v242 = vpack.c.b16 %v238, %v237
    %vm243 = vcmask 523264
    %v245 = vsel %vm243, %v239, 0
    %v248 = vsel %vm243, %v240, 0
    %v251 = vsel %vm243, %v241, 0
    %v254 = vsel %vm243, %v242, 0
    %256 = vmatprep.subr.bf16.mxu0 0
    %257 = vmatpush1.bf16.msra.mxu0 %v171
    %258 = vmatprep.subr.bf16.mxu0 0
    %259 = vmatpush1.bf16.msra.mxu0 %v172
    %260 = vmatprep.subr.bf16.mxu0 0
    %261 = vmatpush1.bf16.msra.mxu0 %v173
    %262 = vmatprep.subr.bf16.mxu0 0
    %263 = vmatpush1.bf16.msra.mxu0 %v174
    %264 = vmatprep.subr.bf16.mxu0 0
    %265 = vmatpush1.bf16.msra.mxu0 0
    %266 = vmatprep.subr.bf16.mxu0 0
    %267 = vmatpush1.bf16.msra.mxu0 0
    %268 = vmatprep.subr.bf16.mxu0 0
    %269 = vmatpush1.bf16.msra.mxu0 0
    %270 = vmatprep.subr.bf16.mxu0 0
    %271 = vmatpush1.bf16.msra.mxu0 0
    %272 = vmatprep.subr.bf16.mxu0 0
    %273 = vmatpush1.bf16.msra.mxu0 0
    %274 = vmatprep.subr.bf16.mxu0 0
    %275 = vmatpush1.bf16.msra.mxu0 0
    %276 = vmatprep.subr.bf16.mxu0 0
    %277 = vmatpush1.bf16.msra.mxu0 0
    %278 = vmatprep.subr.bf16.mxu0 0
    %279 = vmatpush1.bf16.msra.mxu0 0
    %280 = vmatprep.subr.bf16.mxu0 0
    %281 = vmatpush1.bf16.msra.mxu0 0
    %282 = vmatprep.subr.bf16.mxu0 0
    %283 = vmatpush1.bf16.msra.mxu0 0
    %284 = vmatprep.subr.bf16.mxu0 0
    %285 = vmatpush1.bf16.msra.mxu0 0
    %286 = vmatprep.subr.bf16.mxu0 0
    %287 = vmatpush1.bf16.msra.mxu0 0
    %288 = vmatprep.mubr.bf16.mxu0 0
    %289 = vmatmul.mubr.bf16.gmra.mrb[0].mxu0 %v245
    %v290 = vpop.f32.mrb[0].mxu0
    %v291 = vadd.f32 %v186, %v290
    %v292 = vpop.f32.mrb[0].mxu0
    %v293 = vpop.f32.mrb[0].mxu0
    %v294 = vadd.f32 %v191, %v293
    %v295 = vpop.f32.mrb[0].mxu0
    %296 = vmatprep.mubr.bf16.mxu0 0
    %297 = vmatmul.mubr.bf16.gmra.mrb[0].mxu0 %v248
    %v298 = vpop.f32.mrb[0].mxu0
    %v299 = vadd.f32 %v196, %v298
    %v300 = vpop.f32.mrb[0].mxu0
    %v301 = vpop.f32.mrb[0].mxu0
    %v302 = vadd.f32 %v201, %v301
    %v303 = vpop.f32.mrb[0].mxu0
    %304 = vmatprep.mubr.bf16.mxu0 0
    %305 = vmatmul.mubr.bf16.gmra.mrb[0].mxu0 %v251
    %v306 = vpop.f32.mrb[0].mxu0
    %v307 = vadd.f32 %v206, %v306
    %v308 = vpop.f32.mrb[0].mxu0
    %v309 = vpop.f32.mrb[0].mxu0
    %v310 = vadd.f32 %v211, %v309
    %v311 = vpop.f32.mrb[0].mxu0
    %312 = vmatprep.mubr.bf16.mxu0 0
    %313 = vmatmul.mubr.bf16.gmra.mrb[0].mxu0 %v254
    %v314 = vpop.f32.mrb[0].mxu0
    %v315 = vadd.f32 %v216, %v314
    %v316 = vpop.f32.mrb[0].mxu0
    %v317 = vpop.f32.mrb[0].mxu0
    %v318 = vadd.f32 %v221, %v317
    %v319 = vpop.f32.mrb[0].mxu0
    %320 = vdwg.mxu0
    %v321 = vmax.f32 %v291, 0.0
    %v322 = vmax.f32 %v294, 0.0
    %v323 = vmax.f32 %v299, 0.0
    %v324 = vmax.f32 %v302, 0.0
    %v325 = vmax.f32 %v307, 0.0
    %v326 = vmax.f32 %v310, 0.0
    %v327 = vmax.f32 %v315, 0.0
    %v328 = vmax.f32 %v318, 0.0
    %v329 = vld [vmem:[%s5] sm:$0xf]
    %v330 = vld [vmem:[%s5 + $0x4] sm:$0xf]
    %v331 = vld [vmem:[%s5 + $0x8] sm:$0xf]
    %v332 = vld [vmem:[%s5 + $0xc] sm:$0xf]
    %v333 = vld [vmem:[%s5 + $0x10] sm:$0xf]
    %v334 = vld [vmem:[%s5 + $0x14] sm:$0xf]
    %v335 = vld [vmem:[%s5 + $0x18] sm:$0xf]
    %v336 = vld [vmem:[%s5 + $0x1c] sm:$0xf]
    %v337 = vpack.c.bf16 %v322, %v321
    %v338 = vpack.c.bf16 %v324, %v323
    %v339 = vpack.c.bf16 %v326, %v325
    %v340 = vpack.c.bf16 %v328, %v327
    %v341 = vld [vmem:[%s6] sm:$0xff]
    %v342 = vld [vmem:[%s6 + $0x8] sm:$0xff]
    %v343 = vld [vmem:[%s6 + $0x10] sm:$0xff]
    %v344 = vld [vmem:[%s6 + $0x18] sm:$0xff]
    %v345 = vld [vmem:[%s6 + $0x20] sm:$0xff]
    %v346 = vld [vmem:[%s6 + $0x28] sm:$0xff]
    %v347 = vld [vmem:[%s6 + $0x30] sm:$0xff]
    %v348 = vld [vmem:[%s6 + $0x38] sm:$0xff]
    %350 = vset.pattern.permute.xlu0 0
    %351 = vperm.xlu0 %350, %v341
    %v352 = vpop.permute.xlu0 %351
    %355 = vset.pattern.permute.xlu0 0
    %356 = vperm.xlu0 %355, %v342
    %v357 = vpop.permute.xlu0 %356
    %360 = vset.pattern.permute.xlu0 0
    %361 = vperm.xlu0 %360, %v343
    %v362 = vpop.permute.xlu0 %361
    %365 = vset.pattern.permute.xlu0 0
    %366 = vperm.xlu0 %365, %v344
    %v367 = vpop.permute.xlu0 %366
    %370 = vset.pattern.permute.xlu0 0
    %371 = vperm.xlu0 %370, %v345
    %v372 = vpop.permute.xlu0 %371
    %375 = vset.pattern.permute.xlu0 0
    %376 = vperm.xlu0 %375, %v346
    %v377 = vpop.permute.xlu0 %376
    %380 = vset.pattern.permute.xlu0 0
    %381 = vperm.xlu0 %380, %v347
    %v382 = vpop.permute.xlu0 %381
    %385 = vset.pattern.permute.xlu0 0
    %386 = vperm.xlu0 %385, %v348
    %v387 = vpop.permute.xlu0 %386
    %v397 = vunpack.c.l.b16 %v329
    %v398 = vunpack.c.l.b16 %v330
    %v399 = vunpack.c.l.b16 %v331
    %v400 = vunpack.c.l.b16 %v332
    %v401 = vunpack.c.l.b16 %v333
    %v402 = vunpack.c.l.b16 %v334
    %v403 = vunpack.c.l.b16 %v335
    %v404 = vunpack.c.l.b16 %v336
    %v405 = vpack.c.b16 %v398, %v397
    %v406 = vpack.c.b16 %v400, %v399
    %v407 = vpack.c.b16 %v402, %v401
    %v408 = vpack.c.b16 %v404, %v403
    %v410 = vsel %vm243, %v405, 0
    %v413 = vsel %vm243, %v406, 0
    %v416 = vsel %vm243, %v407, 0
    %v419 = vsel %vm243, %v408, 0
    %421 = vmatprep.subr.bf16.mxu0 0
    %422 = vmatpush1.bf16.msra.mxu0 %v337
    %423 = vmatprep.subr.bf16.mxu0 0
    %424 = vmatpush1.bf16.msra.mxu0 %v338
    %425 = vmatprep.subr.bf16.mxu0 0
    %426 = vmatpush1.bf16.msra.mxu0 %v339
    %427 = vmatprep.subr.bf16.mxu0 0
    %428 = vmatpush1.bf16.msra.mxu0 %v340
    %429 = vmatprep.subr.bf16.mxu0 0
    %430 = vmatpush1.bf16.msra.mxu0 0
    %431 = vmatprep.subr.bf16.mxu0 0
    %432 = vmatpush1.bf16.msra.mxu0 0
    %433 = vmatprep.subr.bf16.mxu0 0
    %434 = vmatpush1.bf16.msra.mxu0 0
    %435 = vmatprep.subr.bf16.mxu0 0
    %436 = vmatpush1.bf16.msra.mxu0 0
    %437 = vmatprep.subr.bf16.mxu0 0
    %438 = vmatpush1.bf16.msra.mxu0 0
    %439 = vmatprep.subr.bf16.mxu0 0
    %440 = vmatpush1.bf16.msra.mxu0 0
    %441 = vmatprep.subr.bf16.mxu0 0
    %442 = vmatpush1.bf16.msra.mxu0 0
    %443 = vmatprep.subr.bf16.mxu0 0
    %444 = vmatpush1.bf16.msra.mxu0 0
    %445 = vmatprep.subr.bf16.mxu0 0
    %446 = vmatpush1.bf16.msra.mxu0 0
    %447 = vmatprep.subr.bf16.mxu0 0
    %448 = vmatpush1.bf16.msra.mxu0 0
    %449 = vmatprep.subr.bf16.mxu0 0
    %450 = vmatpush1.bf16.msra.mxu0 0
    %451 = vmatprep.subr.bf16.mxu0 0
    %452 = vmatpush1.bf16.msra.mxu0 0
    %453 = vmatprep.mubr.bf16.mxu0 0
    %454 = vmatmul.mubr.bf16.gmra.mrb[0].mxu0 %v410
    %v455 = vpop.f32.mrb[0].mxu0
    %v456 = vadd.f32 %v352, %v455
    %v457 = vpop.f32.mrb[0].mxu0
    %v458 = vpop.f32.mrb[0].mxu0
    %v459 = vadd.f32 %v357, %v458
    %v460 = vpop.f32.mrb[0].mxu0
    %461 = vmatprep.mubr.bf16.mxu0 0
    %462 = vmatmul.mubr.bf16.gmra.mrb[0].mxu0 %v413
    %v463 = vpop.f32.mrb[0].mxu0
    %v464 = vadd.f32 %v362, %v463
    %v465 = vpop.f32.mrb[0].mxu0
    %v466 = vpop.f32.mrb[0].mxu0
    %v467 = vadd.f32 %v367, %v466
    %v468 = vpop.f32.mrb[0].mxu0
    %469 = vmatprep.mubr.bf16.mxu0 0
    %470 = vmatmul.mubr.bf16.gmra.mrb[0].mxu0 %v416
    %v471 = vpop.f32.mrb[0].mxu0
    %v472 = vadd.f32 %v372, %v471
    %v473 = vpop.f32.mrb[0].mxu0
    %v474 = vpop.f32.mrb[0].mxu0
    %v475 = vadd.f32 %v377, %v474
    %v476 = vpop.f32.mrb[0].mxu0
    %477 = vmatprep.mubr.bf16.mxu0 0
    %478 = vmatmul.mubr.bf16.gmra.mrb[0].mxu0 %v419
    %v479 = vpop.f32.mrb[0].mxu0
    %v480 = vadd.f32 %v382, %v479
    %v481 = vpop.f32.mrb[0].mxu0
    %v482 = vpop.f32.mrb[0].mxu0
    %v483 = vadd.f32 %v387, %v482
    %v484 = vpop.f32.mrb[0].mxu0
    %485 = vdwg.mxu0
    %v486 = vmax.f32 %v456, 0.0
    %v487 = vmax.f32 %v459, 0.0
    %v488 = vmax.f32 %v464, 0.0
    %v489 = vmax.f32 %v467, 0.0
    %v490 = vmax.f32 %v472, 0.0
    %v491 = vmax.f32 %v475, 0.0
    %v492 = vmax.f32 %v480, 0.0
    %v493 = vmax.f32 %v483, 0.0
    %v494 = vld [vmem:[%s7] sm:$0xff]
    %v495 = vld [vmem:[%s7 + $0x8] sm:$0xff]
    %v496 = vld [vmem:[%s7 + $0x10] sm:$0xff]
    %v497 = vld [vmem:[%s7 + $0x18] sm:$0xff]
    %v498 = vld [vmem:[%s7 + $0x20] sm:$0xff]
    %v499 = vld [vmem:[%s7 + $0x28] sm:$0xff]
    %v500 = vld [vmem:[%s7 + $0x30] sm:$0xff]
    %v501 = vld [vmem:[%s7 + $0x38] sm:$0xff]
    %503 = vset.pattern.permute.xlu0 0
    %504 = vperm.xlu0 %503, %v494
    %v505 = vpop.permute.xlu0 %504
    %508 = vset.pattern.permute.xlu0 0
    %509 = vperm.xlu0 %508, %v495
    %v510 = vpop.permute.xlu0 %509
    %513 = vset.pattern.permute.xlu0 0
    %514 = vperm.xlu0 %513, %v496
    %v515 = vpop.permute.xlu0 %514
    %518 = vset.pattern.permute.xlu0 0
    %519 = vperm.xlu0 %518, %v497
    %v520 = vpop.permute.xlu0 %519
    %523 = vset.pattern.permute.xlu0 0
    %524 = vperm.xlu0 %523, %v498
    %v525 = vpop.permute.xlu0 %524
    %528 = vset.pattern.permute.xlu0 0
    %529 = vperm.xlu0 %528, %v499
    %v530 = vpop.permute.xlu0 %529
    %533 = vset.pattern.permute.xlu0 0
    %534 = vperm.xlu0 %533, %v500
    %v535 = vpop.permute.xlu0 %534
    %538 = vset.pattern.permute.xlu0 0
    %539 = vperm.xlu0 %538, %v501
    %v540 = vpop.permute.xlu0 %539
    %v542 = vmul.f32 %v505, %v486
    %v543 = vmul.f32 %v510, %v487
    %v544 = vmul.f32 %v515, %v488
    %v545 = vmul.f32 %v520, %v489
    %v546 = vmul.f32 %v525, %v490
    %v547 = vmul.f32 %v530, %v491
    %v548 = vmul.f32 %v535, %v492
    %v549 = vmul.f32 %v540, %v493
    %v550 = vadd.f32 %v542, %v543
    %v551 = vadd.f32 %v550, %v544
    %v552 = vadd.f32 %v551, %v545
    %v553 = vadd.f32 %v552, %v546
    %v554 = vadd.f32 %v553, %v547
    %v555 = vadd.f32 %v554, %v548
    %v556 = vadd.f32 %v555, %v549
    %v557 = vrot.slane %v556, 4
    %v558 = vadd.f32 %v556, %v557
    %v559 = vrot.slane %v558, 2
    %v560 = vadd.f32 %v558, %v559
    %v561 = vrot.slane %v560, 1
    %v562 = vadd.f32 %v560, %v561
    %v563 = vld [vmem:[#allocation2] sm:$0x1]
    %565 = vset.pattern.permute.xlu0 0
    %566 = vperm.xlu0 %565, %v563
    %v567 = vpop.permute.xlu0 %566
    %v569 = vlaneseq
    %v570 = vshrl.u32 %v569, 7
    %v571 = vsub.s32 0, %v570
    %v572 = vrot.slane %v567, %v571
    %v573 = vadd.f32 %v562, %v572
    %v574 = vmax.f32 %v573, 0.0
    %v575 = vand.u32 2147483647, %v573
    %v576 = vsub.f32 0.0, %v575
    %v577 = vmul.f32 %v576, 1.442695
    %v578 = vpow.pop %v577
    %v579 = vadd.f32 %v578, 1.0
    %v580 = vlog2.pop %v579
    %v581 = vmul.f32 %v580, 0.6931472
    %v582 = vmul.f32 -0.5, %v578
    %v583 = vadd.f32 %v582, 1.0
    %v584 = vmul.f32 %v583, %v578
    %v585 = vand.u32 2147483647, %v578
    %vm586 = vcmp.lt.f32.partialorder %v585, 0.0004427343
    %v587 = vsel %vm586, %v584, %v581
    %v588 = vadd.f32 %v574, %v587
    %589 = vst [vmem:[#allocation3] sm:$0x1] %v588
    // Predicated region
    $region38: #{tpu_custom_call.1} parent=1 // pred_check
      _
    $region39: #{tpu_custom_call.1} parent=1 // pred_check_branch
      %591 = sbr.rel (0) target = $region41
    $region40: #{tpu_custom_call.1} parent=1 // pred_region
      %s593 = ssub.s32 16, 16
      %594 = vsyncadd [#allocation4], %s593
      %s596 = sshll.u32 [#allocation3], 4
      %s597 = int_to_ptr.vmem [resolvable:$true] %s596
      %599 = dma.vmem_to_hbm [thread:$0]  %s597, 16, %s9, [#allocation4]
    $region41: #{tpu_custom_call.1} parent=1 // pred_fallthru
      _
    // Predicated region
    $region42: #{tpu_custom_call.1} parent=1 // pred_check
      _
    $region43: #{tpu_custom_call.1} parent=1 // pred_check_branch
      %601 = sbr.rel (0) target = $region45
    $region44: #{tpu_custom_call.1} parent=1 // pred_region
      %602 = dma.done [#allocation4], 16
    $region45: #{tpu_custom_call.1} parent=1 // pred_fallthru
      _
    %603 = vsyncpa [#allocation4], 1

</llo_original>
